<compile_context>
chip_gen: v6e
topology: v6e:2x2x1
jax: 0.10.0
libtpu: 0.0.40
codegen_flags: <defaults>
</compile_context>

<pallas_src>
import functools

import numpy as np
import jax
import jax.numpy as jnp
from jax import lax
from jax.experimental import pallas as pl
from jax.experimental.pallas import tpu as pltpu

LANES = 128
MAX_TILE_ROWS = 8192                 # 8192 x 128 f32 = 4 MiB per operand tile
VMEM_LIMIT_BYTES = 40 * 1024 * 1024  # ~24 MiB working set + headroom (< v7x 64 MiB)


def _round_up(x, m):
    return (x + m - 1) // m * m


def _cdiv(a, b):
    return -(-a // b)


def _mcl_kernel(pre_ref, real_ref, stats_ref, cmask_ref, *,
                ranges, vals, rows, tile_rows, strip, stats_rows,
                needs_row_mask, oob_value):
    """Fused masked-L1 lane partials + class-mask construction for one tile.

    stats_ref : (stats_rows, 128) f32 per-block lane partials
                row 2*i   : per-lane sum of |pre-real| where class-i mask holds
                row 2*i+1 : per-lane count of class-i mask
    cmask_ref : (tile_rows, 128) f32 rescaled class-mask tile.
    """
    num_classes = len(ranges)
    n_strips = tile_rows // strip

    # Loop-invariant values hoisted out of the strip loop (JAX does not CSE
    # broadcasts inside loops).
    cmf_init = jnp.full((strip, LANES), vals[0], jnp.float32)
    if needs_row_mask:
        row_iota = lax.broadcasted_iota(jnp.int32, (strip, LANES), 0)
        valid_rows = rows - pl.program_id(0) * tile_rows

    def body(s, accs):
        r0 = pl.multiple_of(s * strip, strip)
        pre = pre_ref[pl.ds(r0, strip), :].astype(jnp.float32)
        real = real_ref[pl.ds(r0, strip), :].astype(jnp.float32)
        absdiff = jnp.abs(pre - real)

        if needs_row_mask:
            # Rows past the logical array end (garbage reads of a partial last
            # block) are pushed outside every class range so they contribute
            # nothing to the statistics. The class-mask rows there are sliced
            # off by the wrapper, so only the stats need guarding.
            real_stat = jnp.where((row_iota + r0) < valid_rows, real, oob_value)
        else:
            real_stat = real

        cmf = cmf_init
        new_accs = []
        for i, (lb, ub) in enumerate(ranges):
            m = (real_stat >= lb) & (real_stat <= ub)
            # sublane-only reductions -> (1, 128) lane partials; cross-lane /
            # cross-block reduction happens once in the wrapper.
            a_part = jnp.sum(jnp.where(m, absdiff, 0.0), axis=0, keepdims=True)
            c_part = jnp.sum(m.astype(jnp.float32), axis=0, keepdims=True)
            new_accs.append(accs[2 * i] + a_part)
            new_accs.append(accs[2 * i + 1] + c_part)
            if i > 0:  # class-0 select is a no-op (cmf already holds vals[0])
                cmf = jnp.where(m, vals[i], cmf)

        cmask_ref[pl.ds(r0, strip), :] = cmf
        return tuple(new_accs)

    init = tuple(jnp.zeros((1, LANES), jnp.float32) for _ in range(2 * num_classes))
    accs = lax.fori_loop(0, n_strips, body, init)

    # Direct row writes of the loop-carried lane partials (no concatenate).
    for i in range(2 * num_classes):
        stats_ref[pl.ds(i, 1), :] = accs[i]
    pad_rows = stats_rows - 2 * num_classes
    if pad_rows:
        stats_ref[pl.ds(2 * num_classes, pad_rows), :] = jnp.zeros(
            (pad_rows, LANES), jnp.float32)


def mcl_loss(pre_img, real_img, class_mask_range, class_weight, class_norm=False):
    """MCLLoss forward (class_mask=None branch).

    Returns (loss, per_class_losses, class_mask)."""
    # ---- __init__ semantics (static config, plain Python) ----
    min_v, max_v = class_mask_range[0]
    ranges = [
        (2.0 * (lb - min_v) / (max_v - min_v) - 1.0,
         2.0 * (ub - min_v) / (max_v - min_v) - 1.0)
        for (lb, ub) in class_mask_range
    ]
    wsum = float(sum(class_weight))
    weights = [float(w) / wsum for w in class_weight]
    num_classes = len(ranges)

    # Per-class rescaled class-mask values, f32 step-by-step to match the
    # reference's f32 arithmetic: 2*i/(n-1) - 1.
    denom = np.float32(max(num_classes - 1, 1))
    vals = [float(np.float32(2.0) * np.float32(i) / denom - np.float32(1.0))
            for i in range(num_classes)]

    # class_norm=True computes temps that the reference code never uses.
    del class_norm

    orig_shape = pre_img.shape

    # Keep bf16/f32 inputs in their native dtype (in-kernel upcast per strip);
    # anything else is cast to f32 once here.
    if (pre_img.dtype != real_img.dtype
            or pre_img.dtype not in (jnp.float32, jnp.bfloat16)):
        pre_img = pre_img.astype(jnp.float32)
        real_img = real_img.astype(jnp.float32)
    in_dtype = pre_img.dtype
    sub = 16 if in_dtype == jnp.bfloat16 else 8

    flat_pre = pre_img.reshape(-1)
    flat_real = real_img.reshape(-1)
    total = flat_pre.shape[0]

    # Value strictly above every class upper bound -> matches no class.
    oob_value = float(max(ub for _, ub in ranges)) + 1.0

    # Pad only when the element count is not a multiple of LANES (or tiny):
    # pad `real` with oob_value so padded lanes contribute nothing.
    rows = max(_cdiv(total, LANES), sub)
    pad_elems = rows * LANES - total
    if pad_elems:
        flat_pre = jnp.pad(flat_pre, (0, pad_elems))
        flat_real = jnp.pad(flat_real, (0, pad_elems), constant_values=oob_value)

    pre2d = flat_pre.reshape(rows, LANES)
    real2d = flat_real.reshape(rows, LANES)

    # ---- tiling: big tiles; >= 2 (even) blocks so both v7x TCs get work ----
    nb = _cdiv(rows, MAX_TILE_ROWS)
    if nb == 1 and rows > sub:
        nb = 2
    if nb > 1 and nb % 2:
        nb += 1
    tile_rows = _round_up(_cdiv(rows, nb), sub)
    if tile_rows >= 64:
        tile_rows = _round_up(tile_rows, 64)
    num_blocks = max(1, _cdiv(rows, tile_rows))

    strip_candidates = (32, 16) if sub == 16 else (32, 16, 8)
    strip = next(c for c in strip_candidates if tile_rows % c == 0)

    needs_row_mask = (rows % tile_rows) != 0
    out_rows = num_blocks * tile_rows  # padded output rows -> no OOB writes

    stats_rows = _round_up(2 * num_classes, 8)
    kernel = functools.partial(
        _mcl_kernel, ranges=ranges, vals=vals, rows=rows, tile_rows=tile_rows,
        strip=strip, stats_rows=stats_rows, needs_row_mask=needs_row_mask,
        oob_value=oob_value)

    stats, cmask2d = pl.pallas_call(
        kernel,
        out_shape=(
            jax.ShapeDtypeStruct((num_blocks, stats_rows, LANES), jnp.float32),
            jax.ShapeDtypeStruct((out_rows, LANES), jnp.float32),
        ),
        grid_spec=pltpu.PrefetchScalarGridSpec(
            num_scalar_prefetch=0,
            grid=(num_blocks,),
            in_specs=[
                pl.BlockSpec((tile_rows, LANES), lambda i: (i, 0)),
                pl.BlockSpec((tile_rows, LANES), lambda i: (i, 0)),
            ],
            out_specs=[
                # per-block partial stats -> no resident accumulator, so the
                # grid axis can be megacore-parallel (2 TCs on v7x).
                pl.BlockSpec((None, stats_rows, LANES), lambda i: (i, 0, 0)),
                pl.BlockSpec((tile_rows, LANES), lambda i: (i, 0)),
            ],
        ),
        compiler_params=pltpu.CompilerParams(
            dimension_semantics=("parallel",),
            vmem_limit_bytes=VMEM_LIMIT_BYTES),
    )(pre2d, real2d)

    # ---- tiny glue: one cross-block/lane reduction + zero-count guard ----
    sums = jnp.sum(stats, axis=(0, 2))                 # (stats_rows,)
    asums = sums[0:2 * num_classes:2]
    cnts = sums[1:2 * num_classes:2]
    wvec = jnp.asarray(weights, jnp.float32)
    losses = jnp.where(cnts > 0, asums / cnts, 0.0) * wvec
    per_class_losses = [losses[i] for i in range(num_classes)]
    loss = jnp.sum(losses)

    class_mask = cmask2d.reshape(-1)[:total].reshape(orig_shape)
    return loss, per_class_losses, class_mask


def _reference(pre_img, real_img, class_mask_range, class_weight):
    """Pure-JAX reference of the same forward for a sanity check."""
    min_v, max_v = class_mask_range[0]
    ranges = [
        (2.0 * (lb - min_v) / (max_v - min_v) - 1.0,
         2.0 * (ub - min_v) / (max_v - min_v) - 1.0)
        for (lb, ub) in class_mask_range
    ]
    wsum = float(sum(class_weight))
    weights = [float(w) / wsum for w in class_weight]
    losses = []
    cm = jnp.zeros_like(real_img, dtype=jnp.int32)
    for i, (lb, ub) in enumerate(ranges):
        mask = ((real_img >= lb) & (real_img <= ub)).astype(jnp.float32)
        cnt = mask.sum()
        asum = jnp.abs(pre_img * mask - real_img * mask).sum()
        losses.append(jnp.where(cnt > 0, asum / cnt, 0.0) * weights[i])
        cm = jnp.where(mask > 0, i, cm)
    loss = sum(losses)
    cmf = 2.0 * cm.astype(jnp.float32) / (len(ranges) - 1) - 1.0
    return loss, losses, cmf


if __name__ == "__main__":
    key = jax.random.PRNGKey(0)
    k1, k2, k3, k4 = jax.random.split(key, 4)

    class_mask_range = [[0.0, 255.0], [0.0, 80.0], [80.0, 160.0], [160.0, 255.0]]
    class_weight = [1.0, 2.0, 2.0, 1.0]

    def check(pre_img, real_img):
        loss, per_class, class_mask = mcl_loss(
            pre_img, real_img, class_mask_range, class_weight, class_norm=False)
        jax.block_until_ready(loss)
        jax.block_until_ready(class_mask)
        ref_loss, ref_per, ref_cm = _reference(
            pre_img, real_img, class_mask_range, class_weight)
        assert jnp.allclose(loss, ref_loss, rtol=1e-5, atol=1e-5)
        for a, b in zip(per_class, ref_per):
            assert jnp.allclose(a, b, rtol=1e-5, atol=1e-5)
        assert jnp.allclose(class_mask, ref_cm)

    # Main case: NCHW image batch (images roughly in [-1, 1], matching the
    # [-1, 1] renormalised class ranges).
    N, C, H, W = 2, 4, 16, 16
    check(jax.random.uniform(k1, (N, C, H, W), jnp.float32, -1.0, 1.0),
          jax.random.uniform(k2, (N, C, H, W), jnp.float32, -1.0, 1.0))

    # Odd size: exercises the partial (row-masked) last block path.
    check(jax.random.uniform(k3, (1, 1, 40, 128), jnp.float32, -1.0, 1.0),
          jax.random.uniform(k4, (1, 1, 40, 128), jnp.float32, -1.0, 1.0))

    print("KERNEL_OK")
</pallas_src>

<mosaic_0001>
module attributes {stable_mosaic.version = 11 : i64} {
  func.func @_mcl_kernel(%arg0: i32, %arg1: memref<8x128xf32, #tpu.memory_space<vmem>>, %arg2: memref<8x128xf32, #tpu.memory_space<vmem>>, %arg3: memref<1x8x128xf32, #tpu.memory_space<vmem>>, %arg4: memref<8x128xf32, #tpu.memory_space<vmem>>) attributes {dimension_semantics = [#tpu.dimension_semantics<parallel>], iteration_bounds = array<i64: 2>, scalar_prefetch = 0 : i64, scratch_operands = 0 : i64, tpu.core_type = #tpu.core_type<tc>, window_params = [{transform_indices = @transform_0, window_bounds = array<i64: 8, 128>}, {transform_indices = @transform_1, window_bounds = array<i64: 8, 128>}, {transform_indices = @transform_2, window_bounds = array<i64: 1, 8, 128>}, {transform_indices = @transform_3, window_bounds = array<i64: 8, 128>}]} {
    %cst = arith.constant -1.000000e+00 : f32
    %0 = vector.broadcast %cst : f32 to vector<8x128xf32>
    %cst_0 = arith.constant 0.000000e+00 : f32
    %1 = vector.broadcast %cst_0 : f32 to vector<1x128xf32>
    %cst_1 = arith.constant 0.000000e+00 : f32
    %2 = vector.broadcast %cst_1 : f32 to vector<1x128xf32>
    %cst_2 = arith.constant 0.000000e+00 : f32
    %3 = vector.broadcast %cst_2 : f32 to vector<1x128xf32>
    %cst_3 = arith.constant 0.000000e+00 : f32
    %4 = vector.broadcast %cst_3 : f32 to vector<1x128xf32>
    %cst_4 = arith.constant 0.000000e+00 : f32
    %5 = vector.broadcast %cst_4 : f32 to vector<1x128xf32>
    %cst_5 = arith.constant 0.000000e+00 : f32
    %6 = vector.broadcast %cst_5 : f32 to vector<1x128xf32>
    %cst_6 = arith.constant 0.000000e+00 : f32
    %7 = vector.broadcast %cst_6 : f32 to vector<1x128xf32>
    %cst_7 = arith.constant 0.000000e+00 : f32
    %8 = vector.broadcast %cst_7 : f32 to vector<1x128xf32>
    %c0_i32 = arith.constant 0 : i32
    %c8_i32 = arith.constant 8 : i32
    %9 = arith.muli %c0_i32, %c8_i32 : i32
    %10 = tpu.assume_multiple %9, 8 : i32
    %11 = arith.index_cast %10 : i32 to index
    %c0 = arith.constant 0 : index
    %12 = vector.load %arg1[%11, %c0] : memref<8x128xf32, #tpu.memory_space<vmem>>, vector<8x128xf32>
    %13 = arith.index_cast %10 : i32 to index
    %c0_8 = arith.constant 0 : index
    %14 = vector.load %arg2[%13, %c0_8] : memref<8x128xf32, #tpu.memory_space<vmem>>, vector<8x128xf32>
    %15 = arith.subf %12, %14 : vector<8x128xf32>
    %16 = math.absf %15 : vector<8x128xf32>
    %cst_9 = arith.constant -1.000000e+00 : f32
    %17 = vector.broadcast %cst_9 : f32 to vector<8x128xf32>
    %18 = arith.cmpf oge, %14, %17 : vector<8x128xf32>
    %cst_10 = arith.constant 1.000000e+00 : f32
    %19 = vector.broadcast %cst_10 : f32 to vector<8x128xf32>
    %20 = arith.cmpf ole, %14, %19 : vector<8x128xf32>
    %21 = arith.andi %18, %20 : vector<8x128xi1>
    %cst_11 = arith.constant 0.000000e+00 : f32
    %22 = vector.broadcast %cst_11 : f32 to vector<8x128xf32>
    %23 = arith.select %21, %16, %22 : vector<8x128xi1>, vector<8x128xf32>
    %cst_12 = arith.constant dense<0.000000e+00> : vector<128xf32>
    %24 = vector.multi_reduction <add>, %23, %cst_12 [0] : vector<8x128xf32> to vector<128xf32>
    %25 = vector.shape_cast %24 : vector<128xf32> to vector<1x128xf32>
    %26 = arith.extui %21 : vector<8x128xi1> to vector<8x128xi32>
    %27 = arith.sitofp %26 : vector<8x128xi32> to vector<8x128xf32>
    %cst_13 = arith.constant dense<0.000000e+00> : vector<128xf32>
    %28 = vector.multi_reduction <add>, %27, %cst_13 [0] : vector<8x128xf32> to vector<128xf32>
    %29 = vector.shape_cast %28 : vector<128xf32> to vector<1x128xf32>
    %30 = arith.addf %1, %25 : vector<1x128xf32>
    %31 = arith.addf %2, %29 : vector<1x128xf32>
    %cst_14 = arith.constant -1.000000e+00 : f32
    %32 = vector.broadcast %cst_14 : f32 to vector<8x128xf32>
    %33 = arith.cmpf oge, %14, %32 : vector<8x128xf32>
    %cst_15 = arith.constant -0.372549027 : f32
    %34 = vector.broadcast %cst_15 : f32 to vector<8x128xf32>
    %35 = arith.cmpf ole, %14, %34 : vector<8x128xf32>
    %36 = arith.andi %33, %35 : vector<8x128xi1>
    %cst_16 = arith.constant 0.000000e+00 : f32
    %37 = vector.broadcast %cst_16 : f32 to vector<8x128xf32>
    %38 = arith.select %36, %16, %37 : vector<8x128xi1>, vector<8x128xf32>
    %cst_17 = arith.constant dense<0.000000e+00> : vector<128xf32>
    %39 = vector.multi_reduction <add>, %38, %cst_17 [0] : vector<8x128xf32> to vector<128xf32>
    %40 = vector.shape_cast %39 : vector<128xf32> to vector<1x128xf32>
    %41 = arith.extui %36 : vector<8x128xi1> to vector<8x128xi32>
    %42 = arith.sitofp %41 : vector<8x128xi32> to vector<8x128xf32>
    %cst_18 = arith.constant dense<0.000000e+00> : vector<128xf32>
    %43 = vector.multi_reduction <add>, %42, %cst_18 [0] : vector<8x128xf32> to vector<128xf32>
    %44 = vector.shape_cast %43 : vector<128xf32> to vector<1x128xf32>
    %45 = arith.addf %3, %40 : vector<1x128xf32>
    %46 = arith.addf %4, %44 : vector<1x128xf32>
    %cst_19 = arith.constant -0.333333313 : f32
    %47 = vector.broadcast %cst_19 : f32 to vector<8x128xf32>
    %48 = arith.select %36, %47, %0 : vector<8x128xi1>, vector<8x128xf32>
    %cst_20 = arith.constant -0.372549027 : f32
    %49 = vector.broadcast %cst_20 : f32 to vector<8x128xf32>
    %50 = arith.cmpf oge, %14, %49 : vector<8x128xf32>
    %cst_21 = arith.constant 0.254901975 : f32
    %51 = vector.broadcast %cst_21 : f32 to vector<8x128xf32>
    %52 = arith.cmpf ole, %14, %51 : vector<8x128xf32>
    %53 = arith.andi %50, %52 : vector<8x128xi1>
    %cst_22 = arith.constant 0.000000e+00 : f32
    %54 = vector.broadcast %cst_22 : f32 to vector<8x128xf32>
    %55 = arith.select %53, %16, %54 : vector<8x128xi1>, vector<8x128xf32>
    %cst_23 = arith.constant dense<0.000000e+00> : vector<128xf32>
    %56 = vector.multi_reduction <add>, %55, %cst_23 [0] : vector<8x128xf32> to vector<128xf32>
    %57 = vector.shape_cast %56 : vector<128xf32> to vector<1x128xf32>
    %58 = arith.extui %53 : vector<8x128xi1> to vector<8x128xi32>
    %59 = arith.sitofp %58 : vector<8x128xi32> to vector<8x128xf32>
    %cst_24 = arith.constant dense<0.000000e+00> : vector<128xf32>
    %60 = vector.multi_reduction <add>, %59, %cst_24 [0] : vector<8x128xf32> to vector<128xf32>
    %61 = vector.shape_cast %60 : vector<128xf32> to vector<1x128xf32>
    %62 = arith.addf %5, %57 : vector<1x128xf32>
    %63 = arith.addf %6, %61 : vector<1x128xf32>
    %cst_25 = arith.constant 0.333333373 : f32
    %64 = vector.broadcast %cst_25 : f32 to vector<8x128xf32>
    %65 = arith.select %53, %64, %48 : vector<8x128xi1>, vector<8x128xf32>
    %cst_26 = arith.constant 0.254901975 : f32
    %66 = vector.broadcast %cst_26 : f32 to vector<8x128xf32>
    %67 = arith.cmpf oge, %14, %66 : vector<8x128xf32>
    %cst_27 = arith.constant 1.000000e+00 : f32
    %68 = vector.broadcast %cst_27 : f32 to vector<8x128xf32>
    %69 = arith.cmpf ole, %14, %68 : vector<8x128xf32>
    %70 = arith.andi %67, %69 : vector<8x128xi1>
    %cst_28 = arith.constant 0.000000e+00 : f32
    %71 = vector.broadcast %cst_28 : f32 to vector<8x128xf32>
    %72 = arith.select %70, %16, %71 : vector<8x128xi1>, vector<8x128xf32>
    %cst_29 = arith.constant dense<0.000000e+00> : vector<128xf32>
    %73 = vector.multi_reduction <add>, %72, %cst_29 [0] : vector<8x128xf32> to vector<128xf32>
    %74 = vector.shape_cast %73 : vector<128xf32> to vector<1x128xf32>
    %75 = arith.extui %70 : vector<8x128xi1> to vector<8x128xi32>
    %76 = arith.sitofp %75 : vector<8x128xi32> to vector<8x128xf32>
    %cst_30 = arith.constant dense<0.000000e+00> : vector<128xf32>
    %77 = vector.multi_reduction <add>, %76, %cst_30 [0] : vector<8x128xf32> to vector<128xf32>
    %78 = vector.shape_cast %77 : vector<128xf32> to vector<1x128xf32>
    %79 = arith.addf %7, %74 : vector<1x128xf32>
    %80 = arith.addf %8, %78 : vector<1x128xf32>
    %cst_31 = arith.constant 1.000000e+00 : f32
    %81 = vector.broadcast %cst_31 : f32 to vector<8x128xf32>
    %82 = arith.select %70, %81, %65 : vector<8x128xi1>, vector<8x128xf32>
    %83 = arith.index_cast %10 : i32 to index
    %c0_32 = arith.constant 0 : index
    %84 = vector.load %arg4[%83, %c0_32] : memref<8x128xf32, #tpu.memory_space<vmem>>, vector<8x128xf32>
    tpu.vector_store %arg4[%83, %c0_32], %82 {strides = array<i32>} : memref<8x128xf32, #tpu.memory_space<vmem>>, vector<8x128xf32>,
    %c1_i32 = arith.constant 1 : i32
    %c0_33 = arith.constant 0 : index
    %c0_34 = arith.constant 0 : index
    %c0_35 = arith.constant 0 : index
    %85 = vector.load %arg3[%c0_33, %c0_34, %c0_35] : memref<1x8x128xf32, #tpu.memory_space<vmem>>, vector<1x1x128xf32>
    %86 = vector.shape_cast %85 : vector<1x1x128xf32> to vector<1x128xf32>
    %87 = vector.shape_cast %30 : vector<1x128xf32> to vector<1x1x128xf32>
    tpu.vector_store %arg3[%c0_33, %c0_34, %c0_35], %87 {strides = array<i32>} : memref<1x8x128xf32, #tpu.memory_space<vmem>>, vector<1x1x128xf32>,
    %c0_36 = arith.constant 0 : index
    %c1 = arith.constant 1 : index
    %c0_37 = arith.constant 0 : index
    %88 = vector.load %arg3[%c0_36, %c1, %c0_37] : memref<1x8x128xf32, #tpu.memory_space<vmem>>, vector<1x1x128xf32>
    %89 = vector.shape_cast %88 : vector<1x1x128xf32> to vector<1x128xf32>
    %90 = vector.shape_cast %31 : vector<1x128xf32> to vector<1x1x128xf32>
    tpu.vector_store %arg3[%c0_36, %c1, %c0_37], %90 {strides = array<i32>} : memref<1x8x128xf32, #tpu.memory_space<vmem>>, vector<1x1x128xf32>,
    %c0_38 = arith.constant 0 : index
    %c2 = arith.constant 2 : index
    %c0_39 = arith.constant 0 : index
    %91 = vector.load %arg3[%c0_38, %c2, %c0_39] : memref<1x8x128xf32, #tpu.memory_space<vmem>>, vector<1x1x128xf32>
    %92 = vector.shape_cast %91 : vector<1x1x128xf32> to vector<1x128xf32>
    %93 = vector.shape_cast %45 : vector<1x128xf32> to vector<1x1x128xf32>
    tpu.vector_store %arg3[%c0_38, %c2, %c0_39], %93 {strides = array<i32>} : memref<1x8x128xf32, #tpu.memory_space<vmem>>, vector<1x1x128xf32>,
    %c0_40 = arith.constant 0 : index
    %c3 = arith.constant 3 : index
    %c0_41 = arith.constant 0 : index
    %94 = vector.load %arg3[%c0_40, %c3, %c0_41] : memref<1x8x128xf32, #tpu.memory_space<vmem>>, vector<1x1x128xf32>
    %95 = vector.shape_cast %94 : vector<1x1x128xf32> to vector<1x128xf32>
    %96 = vector.shape_cast %46 : vector<1x128xf32> to vector<1x1x128xf32>
    tpu.vector_store %arg3[%c0_40, %c3, %c0_41], %96 {strides = array<i32>} : memref<1x8x128xf32, #tpu.memory_space<vmem>>, vector<1x1x128xf32>,
    %c0_42 = arith.constant 0 : index
    %c4 = arith.constant 4 : index
    %c0_43 = arith.constant 0 : index
    %97 = vector.load %arg3[%c0_42, %c4, %c0_43] : memref<1x8x128xf32, #tpu.memory_space<vmem>>, vector<1x1x128xf32>
    %98 = vector.shape_cast %97 : vector<1x1x128xf32> to vector<1x128xf32>
    %99 = vector.shape_cast %62 : vector<1x128xf32> to vector<1x1x128xf32>
    tpu.vector_store %arg3[%c0_42, %c4, %c0_43], %99 {strides = array<i32>} : memref<1x8x128xf32, #tpu.memory_space<vmem>>, vector<1x1x128xf32>,
    %c0_44 = arith.constant 0 : index
    %c5 = arith.constant 5 : index
    %c0_45 = arith.constant 0 : index
    %100 = vector.load %arg3[%c0_44, %c5, %c0_45] : memref<1x8x128xf32, #tpu.memory_space<vmem>>, vector<1x1x128xf32>
    %101 = vector.shape_cast %100 : vector<1x1x128xf32> to vector<1x128xf32>
    %102 = vector.shape_cast %63 : vector<1x128xf32> to vector<1x1x128xf32>
    tpu.vector_store %arg3[%c0_44, %c5, %c0_45], %102 {strides = array<i32>} : memref<1x8x128xf32, #tpu.memory_space<vmem>>, vector<1x1x128xf32>,
    %c0_46 = arith.constant 0 : index
    %c6 = arith.constant 6 : index
    %c0_47 = arith.constant 0 : index
    %103 = vector.load %arg3[%c0_46, %c6, %c0_47] : memref<1x8x128xf32, #tpu.memory_space<vmem>>, vector<1x1x128xf32>
    %104 = vector.shape_cast %103 : vector<1x1x128xf32> to vector<1x128xf32>
    %105 = vector.shape_cast %79 : vector<1x128xf32> to vector<1x1x128xf32>
    tpu.vector_store %arg3[%c0_46, %c6, %c0_47], %105 {strides = array<i32>} : memref<1x8x128xf32, #tpu.memory_space<vmem>>, vector<1x1x128xf32>,
    %c0_48 = arith.constant 0 : index
    %c7 = arith.constant 7 : index
    %c0_49 = arith.constant 0 : index
    %106 = vector.load %arg3[%c0_48, %c7, %c0_49] : memref<1x8x128xf32, #tpu.memory_space<vmem>>, vector<1x1x128xf32>
    %107 = vector.shape_cast %106 : vector<1x1x128xf32> to vector<1x128xf32>
    %108 = vector.shape_cast %80 : vector<1x128xf32> to vector<1x1x128xf32>
    tpu.vector_store %arg3[%c0_48, %c7, %c0_49], %108 {strides = array<i32>} : memref<1x8x128xf32, #tpu.memory_space<vmem>>, vector<1x1x128xf32>,
    return
  }
  func.func @transform_0(%arg0: i32) -> (i32, i32) {
    %c0_i32 = arith.constant 0 : i32
    %c0_i32_0 = arith.constant 0 : i32
    return %arg0, %c0_i32 : i32, i32
  }
  func.func @transform_1(%arg0: i32) -> (i32, i32) {
    %c0_i32 = arith.constant 0 : i32
    %c0_i32_0 = arith.constant 0 : i32
    return %arg0, %c0_i32 : i32, i32
  }
  func.func @transform_2(%arg0: i32) -> (i32, i32, i32) {
    %c0_i32 = arith.constant 0 : i32
    %c0_i32_0 = arith.constant 0 : i32
    %c0_i32_1 = arith.constant 0 : i32
    return %arg0, %c0_i32, %c0_i32_0 : i32, i32, i32
  }
  func.func @transform_3(%arg0: i32) -> (i32, i32) {
    %c0_i32 = arith.constant 0 : i32
    %c0_i32_0 = arith.constant 0 : i32
    return %arg0, %c0_i32 : i32, i32
  }
}

</mosaic_0001>

<llo_original>
// kernel: tpu_custom_call.1
$region0: #{tpu_custom_call.1}
  #allocation0 [shape = 'u32[]', space=smem, size = 0x4, offset = 0x4, fixed_abs, tag = 'smem constant byte address 0x4 - core index']
  #allocation1 [shape = 'u32[144,128]{1,0:T(1,128)}', space=vmem, size = 0x12000, scoped, tag = 'internal scratch']
  %s0 = inlined_call_operand.hbm [shape: f32[16,128], index: 0, kind: input, shape index: {}]
  %s1 = inlined_call_operand.hbm [shape: f32[16,128], index: 1, kind: input, shape index: {}]
  %s2 = inlined_call_operand.hbm [shape: f32[2,8,128], index: 2, kind: output, shape index: {0}]
  %s3 = inlined_call_operand.hbm [shape: f32[16,128], index: 3, kind: output, shape index: {1}]
  %4 = xla_tuple %s2, %s3
  %s5 = sld [smem:[#allocation0]]
  $region57: #{tpu_custom_call.1} parent=0
    _
  %s7 = ssub.s32 1, %s5
  %s8 = scalar_select 0, %s7, %s5
  $region1: #{tpu_custom_call.1} parent=0
    #allocation2 [shape = 'u8[8192]{0}', space=vmem, size = 0x2000, scoped, tag = 'input window, operand 0']
    #allocation3 [shape = 's32[2]{0}', space=sflag, size = 0x8, scoped, tag = 'scoped memory for tpu_custom_call.1']
    #allocation4 [shape = 's32[2]{0}', space=sflag, size = 0x8, scoped, tag = 'scoped memory for tpu_custom_call.1']
    #allocation5 [shape = 'u8[8192]{0}', space=vmem, size = 0x2000, scoped, tag = 'input window, operand 1']
    #allocation6 [shape = 's32[2]{0}', space=sflag, size = 0x8, scoped, tag = 'scoped memory for tpu_custom_call.1']
    #allocation7 [shape = 'u8[8192]{0}', space=vmem, size = 0x2000, scoped, tag = 'output window, operand 0']
    #allocation8 [shape = 'u8[8192]{0}', space=vmem, size = 0x2000, scoped, tag = 'output window, operand 1']
    #allocation9 [shape = 's32[2]{0}', space=sflag, size = 0x8, scoped, tag = 'scoped memory for tpu_custom_call.1']
    %9 = vsyncpa [#allocation3], 0
    %s10 = scalar_lea.sflag [#allocation3], 1
    %11 = vsyncpa %s10, 0
    %12 = vsyncpa [#allocation6], 0
    %s13 = scalar_lea.sflag [#allocation6], 1
    %14 = vsyncpa %s13, 0
    %15 = vsyncpa [#allocation4], 0
    %s16 = scalar_lea.sflag [#allocation4], 1
    %17 = vsyncpa %s16, 0
    %18 = vsyncpa [#allocation9], 0
    %s19 = scalar_lea.sflag [#allocation9], 1
    %20 = vsyncpa %s19, 0
    loop: start=0, step=1, limit=4
    $region2: #{tpu_custom_call.1} parent=1 // loop_pre_header
      _
    $region3: #{tpu_custom_call.1} parent=1 // loop_header
      %s22 = sphi 0, %s26
      %p23 = scmp.ge.s32.totalorder %s22, 4
      %s32 = sphi 0, %s34
      %s35 = sphi 0, %s32
      %s36 = sphi 0, %s35
      %s52 = sphi 0, %s36
      %s58 = sphi 0, %s60
      %s61 = sphi 0, %s58
      %s62 = sphi 0, %s61
      %s78 = sphi 0, %s62
      %s84 = sphi 0, %s86
      %s87 = sphi 0, %s84
      %s88 = sphi 0, %s87
      %s104 = sphi 0, %s88
      %s110 = sphi 0, %s112
      %s113 = sphi 0, %s110
      %s114 = sphi 0, %s113
      %s130 = sphi 0, %s114
    $region4: #{tpu_custom_call.1} parent=1 // loop_header_branch
      %25 = sbr.rel (%p23) target = $region8
    $region5: #{tpu_custom_call.1} parent=1 // loop_body
      %s27 = ssub.s32 %s22, 1
      %s28 = ssub.s32 %s22, 2
      %s29 = sadd.s32 %s22, 1
      %s30 = ssub.s32 %s22, %s29
      %p31 = scmp.eq.s32.totalorder %s30, 0
      %s33 = sadd.s32 %s32, 1
      %s34 = scalar_select %p31, %s32, %s33
      %p37 = pneg %p31
      %p38 = scmp.eq.s32.totalorder %s22, 1
      %p39 = por %p37, %p38
      %p40 = scmp.ne.s32.totalorder %s32, %s35
      %p41 = scmp.eq.s32.totalorder %s22, 0
      %p42 = por %p40, %p41
      %p43 = scmp.ne.s32.totalorder %s32, %s35
      %p44 = scmp.eq.s32.totalorder %s27, 1
      %p45 = por %p43, %p44
      %p46 = scmp.ne.s32.totalorder %s35, %s36
      %p47 = scmp.eq.s32.totalorder %s27, 0
      %p48 = por %p46, %p47
      %p49 = scmp.ne.s32.totalorder %s35, %s36
      %p50 = scmp.eq.s32.totalorder %s28, 1
      %p51 = por %p49, %p50
      %p53 = scmp.ne.s32.totalorder %s36, %s52
      %p54 = scmp.eq.s32.totalorder %s28, 0
      %p55 = por %p53, %p54
      %s56 = ssub.s32 %s22, %s29
      %p57 = scmp.eq.s32.totalorder %s56, 0
      %s59 = sadd.s32 %s58, 1
      %s60 = scalar_select %p57, %s58, %s59
      %p63 = pneg %p57
      %p64 = scmp.eq.s32.totalorder %s22, 1
      %p65 = por %p63, %p64
      %p66 = scmp.ne.s32.totalorder %s58, %s61
      %p67 = scmp.eq.s32.totalorder %s22, 0
      %p68 = por %p66, %p67
      %p69 = scmp.ne.s32.totalorder %s58, %s61
      %p70 = scmp.eq.s32.totalorder %s27, 1
      %p71 = por %p69, %p70
      %p72 = scmp.ne.s32.totalorder %s61, %s62
      %p73 = scmp.eq.s32.totalorder %s27, 0
      %p74 = por %p72, %p73
      %p75 = scmp.ne.s32.totalorder %s61, %s62
      %p76 = scmp.eq.s32.totalorder %s28, 1
      %p77 = por %p75, %p76
      %p79 = scmp.ne.s32.totalorder %s62, %s78
      %p80 = scmp.eq.s32.totalorder %s28, 0
      %p81 = por %p79, %p80
      %s82 = ssub.s32 %s22, %s29
      %p83 = scmp.eq.s32.totalorder %s82, 0
      %s85 = sadd.s32 %s84, 1
      %s86 = scalar_select %p83, %s84, %s85
      %p89 = pneg %p83
      %p90 = scmp.eq.s32.totalorder %s22, 1
      %p91 = por %p89, %p90
      %p92 = scmp.ne.s32.totalorder %s84, %s87
      %p93 = scmp.eq.s32.totalorder %s22, 0
      %p94 = por %p92, %p93
      %p95 = scmp.ne.s32.totalorder %s84, %s87
      %p96 = scmp.eq.s32.totalorder %s27, 1
      %p97 = por %p95, %p96
      %p98 = scmp.ne.s32.totalorder %s87, %s88
      %p99 = scmp.eq.s32.totalorder %s27, 0
      %p100 = por %p98, %p99
      %p101 = scmp.ne.s32.totalorder %s87, %s88
      %p102 = scmp.eq.s32.totalorder %s28, 1
      %p103 = por %p101, %p102
      %p105 = scmp.ne.s32.totalorder %s88, %s104
      %p106 = scmp.eq.s32.totalorder %s28, 0
      %p107 = por %p105, %p106
      %s108 = ssub.s32 %s22, %s29
      %p109 = scmp.eq.s32.totalorder %s108, 0
      %s111 = sadd.s32 %s110, 1
      %s112 = scalar_select %p109, %s110, %s111
      %p115 = pneg %p109
      %p116 = scmp.eq.s32.totalorder %s22, 1
      %p117 = por %p115, %p116
      %p118 = scmp.ne.s32.totalorder %s110, %s113
      %p119 = scmp.eq.s32.totalorder %s22, 0
      %p120 = por %p118, %p119
      %p121 = scmp.ne.s32.totalorder %s110, %s113
      %p122 = scmp.eq.s32.totalorder %s27, 1
      %p123 = por %p121, %p122
      %p124 = scmp.ne.s32.totalorder %s113, %s114
      %p125 = scmp.eq.s32.totalorder %s27, 0
      %p126 = por %p124, %p125
      %p127 = scmp.ne.s32.totalorder %s113, %s114
      %p128 = scmp.eq.s32.totalorder %s28, 1
      %p129 = por %p127, %p128
      %p131 = scmp.ne.s32.totalorder %s114, %s130
      %p132 = scmp.eq.s32.totalorder %s28, 0
      %p133 = por %p131, %p132
      %p134 = scmp.le.s32.totalorder 1, %s22
      %p135 = scmp.lt.s32.totalorder %s22, 3
      %p136 = pnand %p134, %p135
      %p137 = pneg %p136
      // Predicated region
      $region9: #{tpu_custom_call.1} parent=5 // pred_check
        _
      $region10: #{tpu_custom_call.1} parent=5 // pred_check_branch
        %139 = sbr.rel (%p136) target = $region12
      $region11: #{tpu_custom_call.1} parent=5 // pred_region
        %s140 = ssub.s32 %s22, 1
      $region12: #{tpu_custom_call.1} parent=5 // pred_fallthru
        _
      %p141 = scmp.lt.s32.totalorder %s22, 2
      // Predicated region
      $region13: #{tpu_custom_call.1} parent=5 // pred_check
        %p142 = pneg %p141
      $region14: #{tpu_custom_call.1} parent=5 // pred_check_branch
        %144 = sbr.rel (%p142) target = $region16
      $region15: #{tpu_custom_call.1} parent=5 // pred_region
        // Predicated region
        $region17: #{tpu_custom_call.1} parent=15 // pred_check
          %p145 = pneg %p42
        $region18: #{tpu_custom_call.1} parent=15 // pred_check_branch
          %147 = sbr.rel (%p145) target = $region20
        $region19: #{tpu_custom_call.1} parent=15 // pred_region
          %s148 = sand.u32 %s32, 1
          %s149 = scalar_lea.sflag [#allocation3], %s148
          %s150 = sand.u32 %s32, 1
          %s151 = smul.addr %s150, 8
          %s152 = scalar_lea.vmem [#allocation2], %s151
          %s154 = ssub.s32 128, 128
          %155 = vsyncadd %s149, %s154
          %s156 = smul.addr %s22, 128
          %s157 = scalar_lea.hbm %s0, %s156
          %s159 = sshll.u32 %s152, 4
          %s160 = int_to_ptr.vmem [resolvable:$true] %s159
          %162 = dma.hbm_to_vmem [thread:$0]  %s157, 128, %s160, %s149
        $region20: #{tpu_custom_call.1} parent=15 // pred_fallthru
          _
        // Predicated region
        $region21: #{tpu_custom_call.1} parent=15 // pred_check
          %p163 = pneg %p68
        $region22: #{tpu_custom_call.1} parent=15 // pred_check_branch
          %165 = sbr.rel (%p163) target = $region24
        $region23: #{tpu_custom_call.1} parent=15 // pred_region
          %s166 = sand.u32 %s58, 1
          %s167 = scalar_lea.sflag [#allocation6], %s166
          %s168 = sand.u32 %s58, 1
          %s169 = smul.addr %s168, 8
          %s170 = scalar_lea.vmem [#allocation5], %s169
          %s172 = ssub.s32 128, 128
          %173 = vsyncadd %s167, %s172
          %s174 = smul.addr %s22, 128
          %s175 = scalar_lea.hbm %s1, %s174
          %s177 = sshll.u32 %s170, 4
          %s178 = int_to_ptr.vmem [resolvable:$true] %s177
          %180 = dma.hbm_to_vmem [thread:$0]  %s175, 128, %s178, %s167
        $region24: #{tpu_custom_call.1} parent=15 // pred_fallthru
          _
      $region16: #{tpu_custom_call.1} parent=5 // pred_fallthru
        _
      %p181 = scmp.le.s32.totalorder 1, %s22
      %p182 = scmp.lt.s32.totalorder %s22, 3
      %p183 = pnand %p181, %p182
      %p184 = pneg %p183
      // Predicated region
      $region25: #{tpu_custom_call.1} parent=5 // pred_check
        _
      $region26: #{tpu_custom_call.1} parent=5 // pred_check_branch
        %186 = sbr.rel (%p183) target = $region28
      $region27: #{tpu_custom_call.1} parent=5 // pred_region
        %s187 = ssub.s32 %s22, 1
        %s188 = sand.u32 %s35, 1
        %s189 = scalar_lea.sflag [#allocation3], %s188
        %s190 = sand.u32 %s35, 1
        %s191 = smul.addr %s190, 8
        %s192 = scalar_lea.vmem [#allocation2], %s191
        // Predicated region
        $region29: #{tpu_custom_call.1} parent=27 // pred_check
          %p193 = pneg %p48
        $region30: #{tpu_custom_call.1} parent=27 // pred_check_branch
          %195 = sbr.rel (%p193) target = $region32
        $region31: #{tpu_custom_call.1} parent=27 // pred_region
          %196 = dma.done %s189, 128
        $region32: #{tpu_custom_call.1} parent=27 // pred_fallthru
          _
        %s197 = sand.u32 %s61, 1
        %s198 = scalar_lea.sflag [#allocation6], %s197
        %s199 = sand.u32 %s61, 1
        %s200 = smul.addr %s199, 8
        %s201 = scalar_lea.vmem [#allocation5], %s200
        // Predicated region
        $region33: #{tpu_custom_call.1} parent=27 // pred_check
          %p202 = pneg %p74
        $region34: #{tpu_custom_call.1} parent=27 // pred_check_branch
          %204 = sbr.rel (%p202) target = $region36
        $region35: #{tpu_custom_call.1} parent=27 // pred_region
          %205 = dma.done %s198, 128
        $region36: #{tpu_custom_call.1} parent=27 // pred_fallthru
          _
        %s206 = sand.u32 %s35, 1
        %s207 = scalar_lea.sflag [#allocation3], %s206
        %s208 = sand.u32 %s35, 1
        %s209 = smul.addr %s208, 8
        %s210 = scalar_lea.vmem [#allocation2], %s209
        %p211 = pneg %p48
        %p212 = pneg %p45
        %s213 = sand.u32 %s61, 1
        %s214 = scalar_lea.sflag [#allocation6], %s213
        %s215 = sand.u32 %s61, 1
        %s216 = smul.addr %s215, 8
        %s217 = scalar_lea.vmem [#allocation5], %s216
        %p218 = pneg %p74
        %p219 = pneg %p71
        %p220 = pneg %p100
        %p221 = pneg %p97
        %s222 = sand.u32 %s87, 1
        %s223 = scalar_lea.sflag [#allocation4], %s222
        %s224 = sand.u32 %s87, 1
        %s225 = smul.addr %s224, 8
        %s226 = scalar_lea.vmem [#allocation7], %s225
        %p227 = pneg %p126
        %p228 = pneg %p123
        %s229 = sand.u32 %s113, 1
        %s230 = scalar_lea.sflag [#allocation9], %s229
        %s231 = sand.u32 %s113, 1
        %s232 = smul.addr %s231, 8
        %s233 = scalar_lea.vmem [#allocation8], %s232
        %v234 = vld [vmem:[%s192] sm:$0xff]
        %v235 = vld [vmem:[%s201] sm:$0xff]
        %v236 = vsub.f32 %v234, %v235
        %v237 = vand.u32 2147483647, %v236
        %vm238 = vcmp.ge.f32.partialorder %v235, -1.0
        %vm239 = vcmp.le.f32.partialorder %v235, 1.0
        %vm240 = vmand %vm238, %vm239
        %v241 = vsel %vm240, %v237, 0.0
        %v242 = vrot.slane %v241, 4
        %v243 = vadd.f32 %v241, %v242
        %v244 = vrot.slane %v243, 2
        %v245 = vadd.f32 %v243, %v244
        %v246 = vrot.slane %v245, 1
        %v247 = vadd.f32 %v245, %v246
        %v248 = vsel %vm240, 1, 0
        %v249 = vcvt.s32.f32 %v248
        %v250 = vrot.slane %v249, 4
        %v251 = vadd.f32 %v249, %v250
        %v252 = vrot.slane %v251, 2
        %v253 = vadd.f32 %v251, %v252
        %v254 = vrot.slane %v253, 1
        %v255 = vadd.f32 %v253, %v254
        %v256 = vadd.f32 %v247, 0.0
        %v257 = vadd.f32 %v255, 0.0
        %vm258 = vcmp.le.f32.partialorder %v235, -0.37254903
        %vm259 = vmand %vm238, %vm258
        %v260 = vsel %vm259, %v237, 0.0
        %v261 = vrot.slane %v260, 4
        %v262 = vadd.f32 %v260, %v261
        %v263 = vrot.slane %v262, 2
        %v264 = vadd.f32 %v262, %v263
        %v265 = vrot.slane %v264, 1
        %v266 = vadd.f32 %v264, %v265
        %v267 = vsel %vm259, 1, 0
        %v268 = vcvt.s32.f32 %v267
        %v269 = vrot.slane %v268, 4
        %v270 = vadd.f32 %v268, %v269
        %v271 = vrot.slane %v270, 2
        %v272 = vadd.f32 %v270, %v271
        %v273 = vrot.slane %v272, 1
        %v274 = vadd.f32 %v272, %v273
        %v275 = vadd.f32 %v266, 0.0
        %v276 = vadd.f32 %v274, 0.0
        %v277 = vsel %vm259, -0.3333333, -1.0
        %vm278 = vcmp.ge.f32.partialorder %v235, -0.37254903
        %vm279 = vcmp.le.f32.partialorder %v235, 0.25490198
        %vm280 = vmand %vm278, %vm279
        %v281 = vsel %vm280, %v237, 0.0
        %v282 = vrot.slane %v281, 4
        %v283 = vadd.f32 %v281, %v282
        %v284 = vrot.slane %v283, 2
        %v285 = vadd.f32 %v283, %v284
        %v286 = vrot.slane %v285, 1
        %v287 = vadd.f32 %v285, %v286
        %v288 = vsel %vm280, 1, 0
        %v289 = vcvt.s32.f32 %v288
        %v290 = vrot.slane %v289, 4
        %v291 = vadd.f32 %v289, %v290
        %v292 = vrot.slane %v291, 2
        %v293 = vadd.f32 %v291, %v292
        %v294 = vrot.slane %v293, 1
        %v295 = vadd.f32 %v293, %v294
        %v296 = vadd.f32 %v287, 0.0
        %v297 = vadd.f32 %v295, 0.0
        %v298 = vsel %vm280, 0.33333337, %v277
        %vm299 = vcmp.ge.f32.partialorder %v235, 0.25490198
        %vm300 = vmand %vm299, %vm239
        %v301 = vsel %vm300, %v237, 0.0
        %v302 = vrot.slane %v301, 4
        %v303 = vadd.f32 %v301, %v302
        %v304 = vrot.slane %v303, 2
        %v305 = vadd.f32 %v303, %v304
        %v306 = vrot.slane %v305, 1
        %v307 = vadd.f32 %v305, %v306
        %v308 = vsel %vm300, 1, 0
        %v309 = vcvt.s32.f32 %v308
        %v310 = vrot.slane %v309, 4
        %v311 = vadd.f32 %v309, %v310
        %v312 = vrot.slane %v311, 2
        %v313 = vadd.f32 %v311, %v312
        %v314 = vrot.slane %v313, 1
        %v315 = vadd.f32 %v313, %v314
        %v316 = vadd.f32 %v307, 0.0
        %v317 = vadd.f32 %v315, 0.0
        %v318 = vsel %vm300, 1.0, %v298
        %319 = vst [vmem:[%s233] sm:$0xff] %v318
        %320 = vst [vmem:[%s226] sm:$0x1] %v256
        %321 = vst [vmem:[%s226 + $0x1] sm:$0x1] %v257
        %322 = vst [vmem:[%s226 + $0x2] sm:$0x1] %v275
        %323 = vst [vmem:[%s226 + $0x3] sm:$0x1] %v276
        %324 = vst [vmem:[%s226 + $0x4] sm:$0x1] %v296
        %325 = vst [vmem:[%s226 + $0x5] sm:$0x1] %v297
        %326 = vst [vmem:[%s226 + $0x6] sm:$0x1] %v316
        %327 = vst [vmem:[%s226 + $0x7] sm:$0x1] %v317
        %s328 = sand.u32 %s87, 1
        %s329 = scalar_lea.sflag [#allocation4], %s328
        %s330 = sand.u32 %s87, 1
        %s331 = smul.addr %s330, 8
        %s332 = scalar_lea.vmem [#allocation7], %s331
        %s333 = sand.u32 %s113, 1
        %s334 = scalar_lea.sflag [#allocation9], %s333
        %s335 = sand.u32 %s113, 1
        %s336 = smul.addr %s335, 8
        %s337 = scalar_lea.vmem [#allocation8], %s336
        // Predicated region
        $region37: #{tpu_custom_call.1} parent=27 // pred_check
          %p338 = pneg %p97
        $region38: #{tpu_custom_call.1} parent=27 // pred_check_branch
          %340 = sbr.rel (%p338) target = $region40
        $region39: #{tpu_custom_call.1} parent=27 // pred_region
          %s342 = ssub.s32 128, 128
          %343 = vsyncadd %s329, %s342
          %s344 = smul.addr %s27, 128
          %s345 = scalar_lea.hbm %s2, %s344
          %s347 = sshll.u32 %s332, 4
          %s348 = int_to_ptr.vmem [resolvable:$true] %s347
          %350 = dma.vmem_to_hbm [thread:$0]  %s348, 128, %s345, %s329
        $region40: #{tpu_custom_call.1} parent=27 // pred_fallthru
          _
        // Predicated region
        $region41: #{tpu_custom_call.1} parent=27 // pred_check
          %p351 = pneg %p123
        $region42: #{tpu_custom_call.1} parent=27 // pred_check_branch
          %353 = sbr.rel (%p351) target = $region44
        $region43: #{tpu_custom_call.1} parent=27 // pred_region
          %s355 = ssub.s32 128, 128
          %356 = vsyncadd %s334, %s355
          %s357 = smul.addr %s27, 128
          %s358 = scalar_lea.hbm %s3, %s357
          %s360 = sshll.u32 %s337, 4
          %s361 = int_to_ptr.vmem [resolvable:$true] %s360
          %363 = dma.vmem_to_hbm [thread:$0]  %s361, 128, %s358, %s334
        $region44: #{tpu_custom_call.1} parent=27 // pred_fallthru
          _
      $region28: #{tpu_custom_call.1} parent=5 // pred_fallthru
        _
      %p364 = scmp.le.s32.totalorder 2, %s22
      // Predicated region
      $region45: #{tpu_custom_call.1} parent=5 // pred_check
        %p365 = pneg %p364
      $region46: #{tpu_custom_call.1} parent=5 // pred_check_branch
        %367 = sbr.rel (%p365) target = $region48
      $region47: #{tpu_custom_call.1} parent=5 // pred_region
        %s368 = ssub.s32 %s22, 2
        // Predicated region
        $region49: #{tpu_custom_call.1} parent=47 // pred_check
          %p369 = pneg %p103
        $region50: #{tpu_custom_call.1} parent=47 // pred_check_branch
          %371 = sbr.rel (%p369) target = $region52
        $region51: #{tpu_custom_call.1} parent=47 // pred_region
          %s372 = sand.u32 %s88, 1
          %s373 = scalar_lea.sflag [#allocation4], %s372
          %s374 = sand.u32 %s88, 1
          %s375 = smul.addr %s374, 8
          %s376 = scalar_lea.vmem [#allocation7], %s375
          %377 = dma.done %s373, 128
        $region52: #{tpu_custom_call.1} parent=47 // pred_fallthru
          _
        // Predicated region
        $region53: #{tpu_custom_call.1} parent=47 // pred_check
          %p378 = pneg %p129
        $region54: #{tpu_custom_call.1} parent=47 // pred_check_branch
          %380 = sbr.rel (%p378) target = $region56
        $region55: #{tpu_custom_call.1} parent=47 // pred_region
          %s381 = sand.u32 %s114, 1
          %s382 = scalar_lea.sflag [#allocation9], %s381
          %s383 = sand.u32 %s114, 1
          %s384 = smul.addr %s383, 8
          %s385 = scalar_lea.vmem [#allocation8], %s384
          %386 = dma.done %s382, 128
        $region56: #{tpu_custom_call.1} parent=47 // pred_fallthru
          _
      $region48: #{tpu_custom_call.1} parent=5 // pred_fallthru
        _
    $region6: #{tpu_custom_call.1} parent=1 // loop_footer
      %s26 = sadd.s32 1, %s22
    $region7: #{tpu_custom_call.1} parent=1 // loop_footer_branch
      %21 = sbr.rel target = $region3
    $region8: #{tpu_custom_call.1} parent=1 // loop_exit
      _
    %387 = vsyncpa [#allocation3], 1
    %s388 = scalar_lea.sflag [#allocation3], 1
    %389 = vsyncpa %s388, 1
    %390 = vsyncpa [#allocation6], 1
    %s391 = scalar_lea.sflag [#allocation6], 1
    %392 = vsyncpa %s391, 1
    %393 = vsyncpa [#allocation4], 1
    %s394 = scalar_lea.sflag [#allocation4], 1
    %395 = vsyncpa %s394, 1
    %396 = vsyncpa [#allocation9], 1
    %s397 = scalar_lea.sflag [#allocation9], 1
    %398 = vsyncpa %s397, 1

</llo_original>
